<compile_context>
chip_gen: v5e
topology: v5e:2x2
jax: 0.10.0
libtpu: 0.0.40
codegen_flags: <defaults>
</compile_context>

<pallas_src>
import functools

import jax
import jax.numpy as jnp
from jax import lax
from jax.experimental import pallas as pl
from jax.experimental.pallas import tpu as pltpu


def _round_up(x: int, m: int) -> int:
    return (x + m - 1) // m * m


def _score_kernel(uidx_ref, iidx_ref,          # scalar prefetch (SMEM)
                  uf_ref, if_hbm, mask_ref,    # inputs
                  out_ref,                     # output
                  ibuf, sem,                   # scratch (VMEM gather buf, DMA sem)
                  *, tn: int):
    b = pl.program_id(0)
    jn = pl.program_id(1)
    n0 = jn * tn

    # ---- fused gather: DMA the TN needed item rows, HBM -> VMEM ----------
    @pl.loop(0, tn)
    def _issue(n):
        row = iidx_ref[b, n0 + n]
        pltpu.make_async_copy(
            if_hbm.at[pl.ds(row, 1), :],
            ibuf.at[pl.ds(n, 1), :],
            sem.at[0],
        ).start()

    @pl.loop(0, tn)
    def _wait(n):
        pltpu.make_async_copy(
            if_hbm.at[pl.ds(0, 1), :],      # same shape => same wait amount
            ibuf.at[pl.ds(n, 1), :],
            sem.at[0],
        ).wait()

    # ---- compute: [1, H] x [TN, H]^T -> [1, TN]  (MXU, f32 accumulation) --
    u = uf_ref[...].reshape(1, uf_ref.shape[-1])             # [1, H]
    it = ibuf[...]                                            # [TN, H]
    logits = lax.dot_general(u, it, (((1,), (1,)), ((), ())),
                             preferred_element_type=jnp.float32)   # [1, TN]
    logits = logits.reshape(1, 1, tn)
    masked = jnp.where(mask_ref[...] == 0, jnp.float32(-1e13), logits)
    out_ref[...] = masked.astype(out_ref.dtype)


def recommender_logits(user_factors, item_factors, user_idx, item_idx,
                       mask=None, *, n_tile: int = 512):
    """JAX/Pallas equivalent of Model.forward (eval branch)."""
    num_users, H = user_factors.shape
    num_items, _ = item_factors.shape
    B = user_idx.shape[0]
    N = item_idx.shape[1]

    if mask is None:
        mask = jnp.ones((B, N), dtype=jnp.int32)
    mask = mask.astype(jnp.int32)
    item_idx = item_idx.astype(jnp.int32)
    user_idx = user_idx.astype(jnp.int32)

    # Pad N so mask/output tiles are lane-dense multiples of 128; padded
    # slots point at item 0 with mask 0 and are sliced off afterwards.
    tn = min(_round_up(n_tile, 128), _round_up(N, 128))
    n_pad = _round_up(N, tn)
    if n_pad != N:
        pad = ((0, 0), (0, n_pad - N))
        item_idx = jnp.pad(item_idx, pad)
        mask = jnp.pad(mask, pad)

    uf3 = user_factors.reshape(num_users, 1, H)
    mask3 = mask.reshape(B, 1, n_pad)

    grid_spec = pltpu.PrefetchScalarGridSpec(
        num_scalar_prefetch=2,
        grid=(B, n_pad // tn),
        in_specs=[
            # user row, gathered via the scalar-prefetched user index
            pl.BlockSpec((1, 1, H), lambda b, jn, uidx, iidx: (uidx[b], 0, 0)),
            # full item table stays in HBM; rows are DMA-gathered in-kernel
            pl.BlockSpec(memory_space=pl.ANY),
            # mask tile (lane-dense, N on lanes)
            pl.BlockSpec((1, 1, tn), lambda b, jn, uidx, iidx: (b, 0, jn)),
        ],
        out_specs=pl.BlockSpec((1, 1, tn), lambda b, jn, uidx, iidx: (b, 0, jn)),
        scratch_shapes=[
            pltpu.VMEM((tn, H), jnp.float32),
            pltpu.SemaphoreType.DMA((1,)),
        ],
    )

    cost = pl.CostEstimate(
        flops=2 * B * n_pad * H,
        transcendentals=0,
        bytes_accessed=B * n_pad * H * 4 + B * H * 4 + 2 * B * n_pad * 4,
    )

    out = pl.pallas_call(
        functools.partial(_score_kernel, tn=tn),
        out_shape=jax.ShapeDtypeStruct((B, 1, n_pad), jnp.float32),
        grid_spec=grid_spec,
        compiler_params=pltpu.CompilerParams(
            dimension_semantics=("parallel", "parallel")),
        cost_estimate=cost,
    )(user_idx, item_idx, uf3, item_factors, mask3)

    return {"logits": out.reshape(B, n_pad)[:, :N]}


if __name__ == "__main__":
    key = jax.random.PRNGKey(0)
    k_uf, k_if, k_u, k_i, k_m = jax.random.split(key, 5)

    # Synthetic, deterministic "buffers" (inner_model.factors = 31 -> H = 32).
    num_users, num_items, H = 16, 64, 32
    B, N = 4, 200                        # N not a multiple of 128 -> exercises padding

    user_factors = jax.random.normal(k_uf, (num_users, H), dtype=jnp.float32)
    item_factors = jax.random.normal(k_if, (num_items, H), dtype=jnp.float32)

    user_idx = jax.random.randint(k_u, (B,), 0, num_users, dtype=jnp.int32)
    item_idx = jax.random.randint(k_i, (B, N), 0, num_items, dtype=jnp.int32)
    mask = jax.random.bernoulli(k_m, 0.8, (B, N)).astype(jnp.int32)

    out = recommender_logits(user_factors, item_factors, user_idx, item_idx,
                             mask, n_tile=128)      # 2 N-tiles of 128
    logits = jax.block_until_ready(out["logits"])

    # Reference check in plain JAX (mirrors torch.einsum + masked_fill_).
    uf_g = user_factors[user_idx]                       # [B, H]
    if_g = item_factors[item_idx]                       # [B, N, H]
    ref = jnp.einsum("bh,bnh->bn", uf_g, if_g)
    ref = jnp.where(mask == 0, jnp.float32(-1e13), ref)
    assert logits.shape == (B, N) and logits.dtype == jnp.float32
    assert jnp.allclose(logits, ref, atol=1e-4, rtol=1e-4)

    # TODO(synk): the training branch (inner_model.fit + numpy buffer refresh)
    # is a host-side scipy/implicit fit, not expressible as a TPU kernel.
    print("KERNEL_OK")
</pallas_src>

<mosaic_0001>
module attributes {stable_mosaic.version = 11 : i64} {
  func.func @_score_kernel(%arg0: i32, %arg1: i32, %arg2: memref<4xi32, #tpu.memory_space<smem>>, %arg3: memref<4x256xi32, #tpu.memory_space<smem>>, %arg4: memref<1x1x32xf32, #tpu.memory_space<vmem>>, %arg5: memref<64x32xf32, #tpu.memory_space<any>>, %arg6: memref<1x1x128xi32, #tpu.memory_space<vmem>>, %arg7: memref<1x1x128xf32, #tpu.memory_space<vmem>>, %arg8: memref<128x32xf32, #tpu.memory_space<vmem>>, %arg9: memref<1x!tpu.dma_semaphore, #tpu.memory_space<semaphore_mem>>) attributes {dimension_semantics = [#tpu.dimension_semantics<parallel>, #tpu.dimension_semantics<parallel>], iteration_bounds = array<i64: 4, 2>, scalar_prefetch = 2 : i64, scratch_operands = 2 : i64, tpu.core_type = #tpu.core_type<tc>, window_params = [{transform_indices = @transform_0, window_bounds = array<i64: 1, 1, 32>}, {}, {transform_indices = @transform_2, window_bounds = array<i64: 1, 1, 128>}, {transform_indices = @transform_3, window_bounds = array<i64: 1, 1, 128>}]} {
    %c128_i32 = arith.constant 128 : i32
    %0 = arith.muli %arg1, %c128_i32 : i32
    %c0_i32 = arith.constant 0 : i32
    %c128_i32_0 = arith.constant 128 : i32
    %1 = arith.addi %c0_i32, %c128_i32_0 : i32
    %c1_i32 = arith.constant 1 : i32
    scf.for %arg10 = %c0_i32 to %1 step %c1_i32  : i32 {
      %c1_i32_18 = arith.constant 1 : i32
      %14 = arith.muli %arg10, %c1_i32_18 : i32
      %c0_i32_19 = arith.constant 0 : i32
      %15 = arith.addi %c0_i32_19, %14 : i32
      %16 = arith.addi %0, %15 : i32
      %17 = arith.index_cast %arg0 : i32 to index
      %18 = arith.index_cast %16 : i32 to index
      %19 = memref.load %arg3[%17, %18] : memref<4x256xi32, #tpu.memory_space<smem>>
      %c0_i32_20 = arith.constant 0 : i32
      %c0_i32_21 = arith.constant 0 : i32
      %20 = tpu.memref_slice %arg5[%19, %c0_i32_21] : memref<64x32xf32, #tpu.memory_space<any>> -> memref<1x32xf32, #tpu.memory_space<any>>
      %c0_i32_22 = arith.constant 0 : i32
      %21 = tpu.memref_slice %arg8[%15, %c0_i32_22] : memref<128x32xf32, #tpu.memory_space<vmem>> -> memref<1x32xf32, #tpu.memory_space<vmem>>
      %22 = tpu.memref_slice %arg9[%c0_i32_20] : memref<1x!tpu.dma_semaphore, #tpu.memory_space<semaphore_mem>> -> memref<1x!tpu.dma_semaphore, #tpu.memory_space<semaphore_mem>>
      %23 = tpu.memref_squeeze %22 : memref<1x!tpu.dma_semaphore, #tpu.memory_space<semaphore_mem>> -> memref<!tpu.dma_semaphore, #tpu.memory_space<semaphore_mem>>
      tpu.enqueue_dma source(%20 : memref<1x32xf32, #tpu.memory_space<any>>) target(%21 : memref<1x32xf32, #tpu.memory_space<vmem>>) target_semaphore(%23 : memref<!tpu.dma_semaphore, #tpu.memory_space<semaphore_mem>>)
    }
    %c128_i32_1 = arith.constant 128 : i32
    %c0_i32_2 = arith.constant 0 : i32
    %c128_i32_3 = arith.constant 128 : i32
    %2 = arith.addi %c0_i32_2, %c128_i32_3 : i32
    %c1_i32_4 = arith.constant 1 : i32
    scf.for %arg10 = %c0_i32_2 to %2 step %c1_i32_4  : i32 {
      %c1_i32_18 = arith.constant 1 : i32
      %14 = arith.muli %arg10, %c1_i32_18 : i32
      %c0_i32_19 = arith.constant 0 : i32
      %15 = arith.addi %c0_i32_19, %14 : i32
      %c0_i32_20 = arith.constant 0 : i32
      %c0_i32_21 = arith.constant 0 : i32
      %c0_i32_22 = arith.constant 0 : i32
      %16 = tpu.memref_slice %arg5[%c0_i32_21, %c0_i32_22] : memref<64x32xf32, #tpu.memory_space<any>> -> memref<1x32xf32, #tpu.memory_space<any>>
      %c0_i32_23 = arith.constant 0 : i32
      %17 = tpu.memref_slice %arg8[%15, %c0_i32_23] : memref<128x32xf32, #tpu.memory_space<vmem>> -> memref<1x32xf32, #tpu.memory_space<vmem>>
      %18 = tpu.memref_slice %arg9[%c0_i32_20] : memref<1x!tpu.dma_semaphore, #tpu.memory_space<semaphore_mem>> -> memref<1x!tpu.dma_semaphore, #tpu.memory_space<semaphore_mem>>
      %19 = tpu.memref_squeeze %18 : memref<1x!tpu.dma_semaphore, #tpu.memory_space<semaphore_mem>> -> memref<!tpu.dma_semaphore, #tpu.memory_space<semaphore_mem>>
      tpu.wait_dma2 semaphore(%19 : memref<!tpu.dma_semaphore, #tpu.memory_space<semaphore_mem>>) src(%16 : memref<1x32xf32, #tpu.memory_space<any>>) dst(%17 : memref<1x32xf32, #tpu.memory_space<vmem>>)
    }
    %c128_i32_5 = arith.constant 128 : i32
    %c0 = arith.constant 0 : index
    %c0_6 = arith.constant 0 : index
    %c0_7 = arith.constant 0 : index
    %3 = vector.load %arg4[%c0, %c0_6, %c0_7] : memref<1x1x32xf32, #tpu.memory_space<vmem>>, vector<1x1x32xf32>
    %4 = vector.shape_cast %3 : vector<1x1x32xf32> to vector<1x32xf32>
    %c0_8 = arith.constant 0 : index
    %c0_9 = arith.constant 0 : index
    %5 = vector.load %arg8[%c0_8, %c0_9] : memref<128x32xf32, #tpu.memory_space<vmem>>, vector<128x32xf32>
    %cst = arith.constant dense<0.000000e+00> : vector<1x128xf32>
    %6 = tpu.matmul %4, %5, %cst {dimension_numbers = #tpu.dot_dimension_numbers<[1], [1], [0], [0], [0, 0, 1, 0], [], []>} : vector<1x32xf32>, vector<128x32xf32>, vector<1x128xf32> -> vector<1x128xf32>
    %7 = vector.shape_cast %6 : vector<1x128xf32> to vector<1x1x128xf32>
    %c0_10 = arith.constant 0 : index
    %c0_11 = arith.constant 0 : index
    %c0_12 = arith.constant 0 : index
    %8 = vector.load %arg6[%c0_10, %c0_11, %c0_12] : memref<1x1x128xi32, #tpu.memory_space<vmem>>, vector<1x1x128xi32>
    %c0_i32_13 = arith.constant 0 : i32
    %9 = vector.broadcast %c0_i32_13 : i32 to vector<1x1x128xi32>
    %10 = arith.cmpi eq, %8, %9 : vector<1x1x128xi32>
    %cst_14 = arith.constant -9.99999982E+12 : f32
    %11 = vector.broadcast %cst_14 : f32 to vector<1x1x128xf32>
    %12 = arith.select %10, %11, %7 : vector<1x1x128xi1>, vector<1x1x128xf32>
    %c0_15 = arith.constant 0 : index
    %c0_16 = arith.constant 0 : index
    %c0_17 = arith.constant 0 : index
    %13 = vector.load %arg7[%c0_15, %c0_16, %c0_17] : memref<1x1x128xf32, #tpu.memory_space<vmem>>, vector<1x1x128xf32>
    tpu.vector_store %arg7[%c0_15, %c0_16, %c0_17], %12 {strides = array<i32>} : memref<1x1x128xf32, #tpu.memory_space<vmem>>, vector<1x1x128xf32>,
    return
  }
  func.func @transform_0(%arg0: i32, %arg1: i32, %arg2: memref<4xi32, #tpu.memory_space<smem>>, %arg3: memref<4x256xi32, #tpu.memory_space<smem>>) -> (i32, i32, i32) {
    %0 = arith.index_cast %arg0 : i32 to index
    %1 = memref.load %arg2[%0] : memref<4xi32, #tpu.memory_space<smem>>
    %c0_i32 = arith.constant 0 : i32
    %c0_i32_0 = arith.constant 0 : i32
    %c0_i32_1 = arith.constant 0 : i32
    return %1, %c0_i32, %c0_i32_0 : i32, i32, i32
  }
  func.func @transform_2(%arg0: i32, %arg1: i32, %arg2: memref<4xi32, #tpu.memory_space<smem>>, %arg3: memref<4x256xi32, #tpu.memory_space<smem>>) -> (i32, i32, i32) {
    %c0_i32 = arith.constant 0 : i32
    %c0_i32_0 = arith.constant 0 : i32
    return %arg0, %c0_i32, %arg1 : i32, i32, i32
  }
  func.func @transform_3(%arg0: i32, %arg1: i32, %arg2: memref<4xi32, #tpu.memory_space<smem>>, %arg3: memref<4x256xi32, #tpu.memory_space<smem>>) -> (i32, i32, i32) {
    %c0_i32 = arith.constant 0 : i32
    %c0_i32_0 = arith.constant 0 : i32
    return %arg0, %c0_i32, %arg1 : i32, i32, i32
  }
}

</mosaic_0001>

<llo_original>
// kernel: tpu_custom_call.1
$region0: #{tpu_custom_call.1}
  #allocation0 [shape = 'u32[]', space=smem, size = 0x4, offset = 0x4, fixed_abs, tag = 'smem constant byte address 0x4 - core index']
  #allocation1 [shape = 'u32[72,128]{1,0:T(1,128)}', space=vmem, size = 0x9000, scoped, tag = 'internal scratch']
  #allocation2 [shape = 'f32[128,32]{1,0:T(8,128)}', space=vmem, size = 0x10000, scoped, tag = 'scratch operand']
  #allocation3 [shape = 's32[1]{0}', space=sflag, size = 0x4, scoped, tag = 'scratch operand']
  #allocation4 [shape = 's32[1]{0}', space=sflag, size = 0x4, scoped, tag = 'scoped memory for tpu_custom_call.1']
  #allocation5 [shape = 'u8[512]{0}', space=smem, size = 0x200, scoped, tag = 'prefetched SMEM operand 0']
  #allocation6 [shape = 'u8[4096]{0}', space=smem, size = 0x1000, scoped, tag = 'prefetched SMEM operand 1']
  #allocation9 [shape = 's32[]', space=sflag, size = 0x4, offset = 0, fixed_abs, tag = 'sflag constant byte address 0x0 - dummy sync flag']
  %s0 = inlined_call_operand.vmem [shape: s32[4], index: 0, kind: input, shape index: {}]
  %s1 = inlined_call_operand.vmem [shape: s32[4,256], index: 1, kind: input, shape index: {}]
  %s2 = inlined_call_operand.vmem [shape: f32[16,1,32], index: 2, kind: input, shape index: {}]
  %s3 = inlined_call_operand.vmem [shape: f32[64,32], index: 3, kind: input, shape index: {}]
  %s4 = inlined_call_operand.vmem [shape: s32[4,1,256], index: 4, kind: input, shape index: {}]
  %s5 = inlined_call_operand.hbm [shape: f32[4,1,256], index: 5, kind: output, shape index: {}]
  %s6 = sld [smem:[#allocation0]]
  $region85: #{tpu_custom_call.1} parent=0
    _
  %s8 = ssub.s32 1, %s6
  %s9 = scalar_select 0, %s8, %s6
  %s11 = sshll.u32 %s0, 4
  %s12 = int_to_ptr.vmem [resolvable:$true] %s11
  %14 = dma.vmem_to_smem %s12, 16, [#allocation5], [#allocation4]
  %s16 = sshll.u32 %s1, 4
  %s17 = int_to_ptr.vmem [resolvable:$true] %s16
  %19 = dma.vmem_to_smem %s17, 128, [#allocation6], [#allocation4]
  %21 = dma.done [#allocation4], 144
  %22 = sfence
  $region1: #{tpu_custom_call.1} parent=0
    #allocation7 [shape = 'u8[1024]{0}', space=vmem, size = 0x400, scoped, tag = 'output window, operand 0']
    #allocation8 [shape = 's32[2]{0}', space=sflag, size = 0x8, scoped, tag = 'scoped memory for tpu_custom_call.1']
    %23 = vsyncpa [#allocation8], 0
    %s24 = scalar_lea.sflag [#allocation8], 1
    %25 = vsyncpa %s24, 0
    loop: start=0, step=1, limit=10
    $region2: #{tpu_custom_call.1} parent=1 // loop_pre_header
      _
    $region3: #{tpu_custom_call.1} parent=1 // loop_header
      %s27 = sphi 0, %s31
      %p28 = scmp.ge.s32.totalorder %s27, 10
      %s34 = sphi 0, %s46
      %s35 = sphi 0, %s42
      %s36 = sphi 0, %s34
      %s37 = sphi 0, %s35
      %s38 = sphi 0, %s36
      %s39 = sphi 0, %s37
      %s51 = sphi 0, %s53
      %s54 = sphi 0, %s51
      %s55 = sphi 0, %s54
      %s71 = sphi 0, %s55
      %s79 = sphi 0, %s81
      %s82 = sphi 0, %s79
      %s83 = sphi 0, %s82
      %s99 = sphi 0, %s83
      %s107 = sphi 0, %s109
      %s110 = sphi 0, %s107
      %s111 = sphi 0, %s110
      %s127 = sphi 0, %s111
    $region4: #{tpu_custom_call.1} parent=1 // loop_header_branch
      %30 = sbr.rel (%p28) target = $region8
    $region5: #{tpu_custom_call.1} parent=1 // loop_body
      %s32 = ssub.s32 %s27, 1
      %s33 = ssub.s32 %s27, 2
      %s40 = sadd.s32 1, %s35
      %p41 = scmp.ge.s32.totalorder %s40, 2
      %s42 = scalar_select %p41, 0, %s40
      %s43 = sadd.s32 1, %s34
      %s44 = scalar_select %p41, %s43, %s34
      %p45 = scmp.ge.s32.totalorder %s44, 4
      %s46 = scalar_select %p45, 0, %s44
      %s47 = sld [smem:[#allocation5 + %s34]]
      %s48 = sld [smem:[#allocation5 + %s46]]
      %s49 = ssub.s32 %s47, %s48
      %p50 = scmp.eq.s32.totalorder %s49, 0
      %s52 = sadd.s32 %s51, 1
      %s53 = scalar_select %p50, %s51, %s52
      %p56 = pneg %p50
      %p57 = scmp.eq.s32.totalorder %s27, 7
      %p58 = por %p56, %p57
      %p59 = scmp.ne.s32.totalorder %s51, %s54
      %p60 = scmp.eq.s32.totalorder %s27, 0
      %p61 = por %p59, %p60
      %p62 = scmp.ne.s32.totalorder %s51, %s54
      %p63 = scmp.eq.s32.totalorder %s32, 7
      %p64 = por %p62, %p63
      %p65 = scmp.ne.s32.totalorder %s54, %s55
      %p66 = scmp.eq.s32.totalorder %s32, 0
      %p67 = por %p65, %p66
      %p68 = scmp.ne.s32.totalorder %s54, %s55
      %p69 = scmp.eq.s32.totalorder %s33, 7
      %p70 = por %p68, %p69
      %p72 = scmp.ne.s32.totalorder %s55, %s71
      %p73 = scmp.eq.s32.totalorder %s33, 0
      %p74 = por %p72, %p73
      %s75 = ssub.s32 %s34, %s46
      %s76 = ssub.s32 %s35, %s42
      %s77 = sor.u32 %s75, %s76
      %p78 = scmp.eq.s32.totalorder %s77, 0
      %s80 = sadd.s32 %s79, 1
      %s81 = scalar_select %p78, %s79, %s80
      %p84 = pneg %p78
      %p85 = scmp.eq.s32.totalorder %s27, 7
      %p86 = por %p84, %p85
      %p87 = scmp.ne.s32.totalorder %s79, %s82
      %p88 = scmp.eq.s32.totalorder %s27, 0
      %p89 = por %p87, %p88
      %p90 = scmp.ne.s32.totalorder %s79, %s82
      %p91 = scmp.eq.s32.totalorder %s32, 7
      %p92 = por %p90, %p91
      %p93 = scmp.ne.s32.totalorder %s82, %s83
      %p94 = scmp.eq.s32.totalorder %s32, 0
      %p95 = por %p93, %p94
      %p96 = scmp.ne.s32.totalorder %s82, %s83
      %p97 = scmp.eq.s32.totalorder %s33, 7
      %p98 = por %p96, %p97
      %p100 = scmp.ne.s32.totalorder %s83, %s99
      %p101 = scmp.eq.s32.totalorder %s33, 0
      %p102 = por %p100, %p101
      %s103 = ssub.s32 %s34, %s46
      %s104 = ssub.s32 %s35, %s42
      %s105 = sor.u32 %s103, %s104
      %p106 = scmp.eq.s32.totalorder %s105, 0
      %s108 = sadd.s32 %s107, 1
      %s109 = scalar_select %p106, %s107, %s108
      %p112 = pneg %p106
      %p113 = scmp.eq.s32.totalorder %s27, 7
      %p114 = por %p112, %p113
      %p115 = scmp.ne.s32.totalorder %s107, %s110
      %p116 = scmp.eq.s32.totalorder %s27, 0
      %p117 = por %p115, %p116
      %p118 = scmp.ne.s32.totalorder %s107, %s110
      %p119 = scmp.eq.s32.totalorder %s32, 7
      %p120 = por %p118, %p119
      %p121 = scmp.ne.s32.totalorder %s110, %s111
      %p122 = scmp.eq.s32.totalorder %s32, 0
      %p123 = por %p121, %p122
      %p124 = scmp.ne.s32.totalorder %s110, %s111
      %p125 = scmp.eq.s32.totalorder %s33, 7
      %p126 = por %p124, %p125
      %p128 = scmp.ne.s32.totalorder %s111, %s127
      %p129 = scmp.eq.s32.totalorder %s33, 0
      %p130 = por %p128, %p129
      %p131 = scmp.le.s32.totalorder 1, %s27
      %p132 = scmp.lt.s32.totalorder %s27, 9
      %p133 = pnand %p131, %p132
      %p134 = pneg %p133
      // Predicated region
      $region9: #{tpu_custom_call.1} parent=5 // pred_check
        _
      $region10: #{tpu_custom_call.1} parent=5 // pred_check_branch
        %136 = sbr.rel (%p133) target = $region12
      $region11: #{tpu_custom_call.1} parent=5 // pred_region
        %s137 = ssub.s32 %s27, 1
      $region12: #{tpu_custom_call.1} parent=5 // pred_fallthru
        _
      %p138 = scmp.lt.s32.totalorder %s27, 8
      // Predicated region
      $region13: #{tpu_custom_call.1} parent=5 // pred_check
        %p139 = pneg %p138
      $region14: #{tpu_custom_call.1} parent=5 // pred_check_branch
        %141 = sbr.rel (%p139) target = $region16
      $region15: #{tpu_custom_call.1} parent=5 // pred_region
        // Predicated region
        $region17: #{tpu_custom_call.1} parent=15 // pred_check
          %p142 = pneg %p61
        $region18: #{tpu_custom_call.1} parent=15 // pred_check_branch
          %144 = sbr.rel (%p142) target = $region20
        $region19: #{tpu_custom_call.1} parent=15 // pred_region
          %s145 = sld [smem:[#allocation5 + %s34]]
          %p146 = scmp.lt.s32.totalorder %s145, 15
          %s147 = scalar_select %p146, %s145, 15
          %s148 = scalar_lea.vmem %s2, %s147
          %s149 = sld [smem:[#allocation5 + %s34]]
        $region20: #{tpu_custom_call.1} parent=15 // pred_fallthru
          _
        // Predicated region
        $region21: #{tpu_custom_call.1} parent=15 // pred_check
          %p150 = pneg %p89
        $region22: #{tpu_custom_call.1} parent=15 // pred_check_branch
          %152 = sbr.rel (%p150) target = $region24
        $region23: #{tpu_custom_call.1} parent=15 // pred_region
          %p153 = scmp.lt.s32.totalorder %s34, 3
          %s154 = scalar_select %p153, %s34, 3
          %p155 = scmp.lt.s32.totalorder %s35, 1
          %s156 = scalar_select %p155, %s35, 1
          %s157 = smul.addr %s154, 2
          %s158 = sadd.s32 %s156, %s157
          %s159 = scalar_lea.vmem %s4, %s158
        $region24: #{tpu_custom_call.1} parent=15 // pred_fallthru
          _
      $region16: #{tpu_custom_call.1} parent=5 // pred_fallthru
        _
      %p160 = scmp.le.s32.totalorder 1, %s27
      %p161 = scmp.lt.s32.totalorder %s27, 9
      %p162 = pnand %p160, %p161
      %p163 = pneg %p162
      // Predicated region
      $region25: #{tpu_custom_call.1} parent=5 // pred_check
        _
      $region26: #{tpu_custom_call.1} parent=5 // pred_check_branch
        %165 = sbr.rel (%p162) target = $region28
      $region27: #{tpu_custom_call.1} parent=5 // pred_region
        %s166 = ssub.s32 %s27, 1
        %s167 = sld [smem:[#allocation5 + %s36]]
        %p168 = scmp.lt.s32.totalorder %s167, 15
        %s169 = scalar_select %p168, %s167, 15
        %s170 = scalar_lea.vmem %s2, %s169
        %p171 = pneg %p67
        %p172 = pneg %p64
        %p173 = scmp.lt.s32.totalorder %s36, 3
        %s174 = scalar_select %p173, %s36, 3
        %p175 = scmp.lt.s32.totalorder %s37, 1
        %s176 = scalar_select %p175, %s37, 1
        %s177 = smul.addr %s174, 2
        %s178 = sadd.s32 %s176, %s177
        %s179 = scalar_lea.vmem %s4, %s178
        %p180 = pneg %p95
        %p181 = pneg %p92
        %p182 = pneg %p123
        %p183 = pneg %p120
        %s184 = sand.u32 %s110, 1
        %s185 = scalar_lea.sflag [#allocation8], %s184
        %s186 = sand.u32 %s110, 1
        %s187 = scalar_lea.vmem [#allocation7], %s186
        %s188 = sld [smem:[#allocation5 + %s36]]
        %p189 = scmp.lt.s32.totalorder %s188, 15
        %s190 = scalar_select %p189, %s188, 15
        %s191 = scalar_lea.vmem %s2, %s190
        %s192 = sld [smem:[#allocation5 + %s36]]
        %p193 = scmp.lt.s32.totalorder %s36, 3
        %s194 = scalar_select %p193, %s36, 3
        %p195 = scmp.lt.s32.totalorder %s37, 1
        %s196 = scalar_select %p195, %s37, 1
        %s197 = smul.addr %s194, 2
        %s198 = sadd.s32 %s196, %s197
        %s199 = scalar_lea.vmem %s4, %s198
        %s200 = smul.u32 %s37, 128
        loop: start=0, step=1, limit=128
        $region29: #{tpu_custom_call.1} parent=27 // loop_pre_header
          _
        $region30: #{tpu_custom_call.1} parent=27 // loop_header
          %s202 = sphi 0, %s206
          %p203 = scmp.ge.s32.totalorder %s202, 128
        $region31: #{tpu_custom_call.1} parent=27 // loop_header_branch
          %205 = sbr.rel (%p203) target = $region35
        $region32: #{tpu_custom_call.1} parent=27 // loop_body
          %s207 = sadd.s32 %s200, %s202
          %s208 = sshra.s32 %s207, 7
          %s209 = sand.u32 %s207, 127
          %s210 = sshra.s32 %s36, 2
          %s211 = sand.u32 %s36, 3
          %s212 = smul.u32 %s210, 2
          %s213 = sadd.s32 %s208, %s212
          %s214 = smul.u32 %s213, 512
          %s215 = sshra.s32 %s36, 2
          %s216 = sand.u32 %s36, 3
          %s217 = sshra.s32 %s207, 7
          %s218 = sand.u32 %s207, 127
          %s219 = smul.u32 %s216, 128
          %s220 = sadd.s32 %s219, %s218
          %s221 = sadd.s32 %s214, %s220
          %s222 = sld [smem:[#allocation6 + %s221]]
          %s223 = scalar_lea.vmem %s3, %s222
          %s224 = scalar_lea.vmem [#allocation2], %s202
          // Predicated region
          $region36: #{tpu_custom_call.1} parent=32 // pred_check
            _
          $region37: #{tpu_custom_call.1} parent=32 // pred_check_branch
            %226 = sbr.rel target = $region39
          $region38: #{tpu_custom_call.1} parent=32 // pred_region
            // Predicated region
            $region51: #{tpu_custom_call.1} parent=38 // pred_check
              _
            $region52: #{tpu_custom_call.1} parent=38 // pred_check_branch
              %242 = sbr.rel (0) target = $region54
            $region53: #{tpu_custom_call.1} parent=38 // pred_region
              %s244 = ssub.s32 2, 1
              loop: start=0, step=1, limit=1
              $region55: #{tpu_custom_call.1} parent=53 // loop_pre_header
                _
              $region56: #{tpu_custom_call.1} parent=53 // loop_header
                %s246 = sphi 0, %s250
                %p247 = scmp.ge.s32.totalorder %s246, 1
                %s251 = sphi %s223, %s223
                %s252 = sphi %s224, %s224
              $region57: #{tpu_custom_call.1} parent=53 // loop_header_branch
                %249 = sbr.rel (%p247) target = $region61
              $region58: #{tpu_custom_call.1} parent=53 // loop_body
                %v253 = vld [vmem:[%s251] sm:%s244]
                %254 = vst [vmem:[%s252] sm:%s244] %v253
              $region59: #{tpu_custom_call.1} parent=53 // loop_footer
                %s250 = sadd.s32 1, %s246
              $region60: #{tpu_custom_call.1} parent=53 // loop_footer_branch
                %245 = sbr.rel target = $region56
              $region61: #{tpu_custom_call.1} parent=53 // loop_exit
                _
            $region54: #{tpu_custom_call.1} parent=38 // pred_fallthru
              _
          $region39: #{tpu_custom_call.1} parent=32 // pred_fallthru
            _
          // Predicated region
          $region40: #{tpu_custom_call.1} parent=32 // pred_check
            _
          $region41: #{tpu_custom_call.1} parent=32 // pred_check_branch
            %228 = sbr.rel (0) target = $region43
          $region42: #{tpu_custom_call.1} parent=32 // pred_region
            %s230 = ssub.s32 2, 1
            loop: start=0, step=1, limit=1
            $region44: #{tpu_custom_call.1} parent=42 // loop_pre_header
              _
            $region45: #{tpu_custom_call.1} parent=42 // loop_header
              %s232 = sphi 0, %s236
              %p233 = scmp.ge.s32.totalorder %s232, 1
              %s237 = sphi %s223, %s223
              %s238 = sphi %s224, %s224
            $region46: #{tpu_custom_call.1} parent=42 // loop_header_branch
              %235 = sbr.rel (%p233) target = $region50
            $region47: #{tpu_custom_call.1} parent=42 // loop_body
              %v239 = vld [vmem:[%s237] sm:%s230]
              %240 = vst [vmem:[%s238] sm:%s230] %v239
            $region48: #{tpu_custom_call.1} parent=42 // loop_footer
              %s236 = sadd.s32 1, %s232
            $region49: #{tpu_custom_call.1} parent=42 // loop_footer_branch
              %231 = sbr.rel target = $region45
            $region50: #{tpu_custom_call.1} parent=42 // loop_exit
              _
          $region43: #{tpu_custom_call.1} parent=32 // pred_fallthru
            _
          // Predicated region
          $region62: #{tpu_custom_call.1} parent=32 // pred_check
            _
          $region63: #{tpu_custom_call.1} parent=32 // pred_check_branch
            %257 = sbr.rel (0) target = $region65
          $region64: #{tpu_custom_call.1} parent=32 // pred_region
            %258 = vsyncadd [#allocation3], 16
          $region65: #{tpu_custom_call.1} parent=32 // pred_fallthru
            _
        $region33: #{tpu_custom_call.1} parent=27 // loop_footer
          %s206 = sadd.s32 1, %s202
        $region34: #{tpu_custom_call.1} parent=27 // loop_footer_branch
          %201 = sbr.rel target = $region30
        $region35: #{tpu_custom_call.1} parent=27 // loop_exit
          _
        loop: start=0, step=1, limit=128
        $region66: #{tpu_custom_call.1} parent=27 // loop_pre_header
          _
        $region67: #{tpu_custom_call.1} parent=27 // loop_header
          %s260 = sphi 0, %s264
          %p261 = scmp.ge.s32.totalorder %s260, 128
        $region68: #{tpu_custom_call.1} parent=27 // loop_header_branch
          %263 = sbr.rel (%p261) target = $region72
        $region69: #{tpu_custom_call.1} parent=27 // loop_body
          %s265 = smul.u32 1, 1
          %s266 = sshll.u32 %s265, 4
          %267 = dma.done [#allocation3], %s266
        $region70: #{tpu_custom_call.1} parent=27 // loop_footer
          %s264 = sadd.s32 1, %s260
        $region71: #{tpu_custom_call.1} parent=27 // loop_footer_branch
          %259 = sbr.rel target = $region67
        $region72: #{tpu_custom_call.1} parent=27 // loop_exit
          _
        %v268 = vld [vmem:[%s191] sm:$0x1]
        %v269 = vld [vmem:[#allocation2] sm:$0xff]
        %v270 = vld [vmem:[#allocation2 + $0x8] sm:$0xff]
        %v271 = vld [vmem:[#allocation2 + $0x10] sm:$0xff]
        %v272 = vld [vmem:[#allocation2 + $0x18] sm:$0xff]
        %v273 = vld [vmem:[#allocation2 + $0x20] sm:$0xff]
        %v274 = vld [vmem:[#allocation2 + $0x28] sm:$0xff]
        %v275 = vld [vmem:[#allocation2 + $0x30] sm:$0xff]
        %v276 = vld [vmem:[#allocation2 + $0x38] sm:$0xff]
        %v277 = vld [vmem:[#allocation2 + $0x40] sm:$0xff]
        %v278 = vld [vmem:[#allocation2 + $0x48] sm:$0xff]
        %v279 = vld [vmem:[#allocation2 + $0x50] sm:$0xff]
        %v280 = vld [vmem:[#allocation2 + $0x58] sm:$0xff]
        %v281 = vld [vmem:[#allocation2 + $0x60] sm:$0xff]
        %v282 = vld [vmem:[#allocation2 + $0x68] sm:$0xff]
        %v283 = vld [vmem:[#allocation2 + $0x70] sm:$0xff]
        %v284 = vld [vmem:[#allocation2 + $0x78] sm:$0xff]
        %vm285 = vcmask 261120
        %v287 = vsel %vm285, %v268, 0
        %v290 = vsel %vm285, %v269, 0
        %v293 = vsel %vm285, %v270, 0
        %v296 = vsel %vm285, %v271, 0
        %v299 = vsel %vm285, %v272, 0
        %v302 = vsel %vm285, %v273, 0
        %v305 = vsel %vm285, %v274, 0
        %v308 = vsel %vm285, %v275, 0
        %v311 = vsel %vm285, %v276, 0
        %v314 = vsel %vm285, %v277, 0
        %v317 = vsel %vm285, %v278, 0
        %v320 = vsel %vm285, %v279, 0
        %v323 = vsel %vm285, %v280, 0
        %v326 = vsel %vm285, %v281, 0
        %v329 = vsel %vm285, %v282, 0
        %v332 = vsel %vm285, %v283, 0
        %v335 = vsel %vm285, %v284, 0
        %337 = vmatpush.xpose.msra.mxu0 %v335
        %338 = vmatpush.xpose.msra.mxu0 %v332
        %339 = vmatpush.xpose.msra.mxu0 %v329
        %340 = vmatpush.xpose.msra.mxu0 %v326
        %341 = vmatpush.xpose.msra.mxu0 %v323
        %342 = vmatpush.xpose.msra.mxu0 %v320
        %343 = vmatpush.xpose.msra.mxu0 %v317
        %344 = vmatpush.xpose.msra.mxu0 %v314
        %345 = vmatpush.xpose.msra.mxu0 %v311
        %346 = vmatpush.xpose.msra.mxu0 %v308
        %347 = vmatpush.xpose.msra.mxu0 %v305
        %348 = vmatpush.xpose.msra.mxu0 %v302
        %349 = vmatpush.xpose.msra.mxu0 %v299
        %350 = vmatpush.xpose.msra.mxu0 %v296
        %351 = vmatpush.xpose.msra.mxu0 %v293
        %352 = vmatpush.xpose.msra.mxu0 %v290
        %353 = vmatmul.f32.gmra.mxu0 %v287
        %v354 = vpop.f32.mrf.mxu0
        %v355 = vadd.f32 0.0, %v354
        %356 = vdwg.mxu0
        %v357 = vld [vmem:[%s199] sm:$0x1]
        %vm358 = vcmp.eq.s32.totalorder %v357, 0
        %v359 = vsel %vm358, -1e+13, %v355
        %360 = vst [vmem:[%s187] sm:$0x1] %v359
        %s361 = sand.u32 %s110, 1
        %s362 = scalar_lea.sflag [#allocation8], %s361
        %s363 = sand.u32 %s110, 1
        %s364 = scalar_lea.vmem [#allocation7], %s363
        // Predicated region
        $region73: #{tpu_custom_call.1} parent=27 // pred_check
          %p365 = pneg %p120
        $region74: #{tpu_custom_call.1} parent=27 // pred_check_branch
          %367 = sbr.rel (%p365) target = $region76
        $region75: #{tpu_custom_call.1} parent=27 // pred_region
          %369 = vsyncadd %s362, 0
          %s370 = smul.addr %s36, 2
          %s371 = sadd.s32 %s37, %s370
          %s372 = scalar_lea.hbm %s5, %s371
          %s374 = sshll.u32 %s364, 4
          %s375 = int_to_ptr.vmem [resolvable:$true] %s374
          %s376 = sshll.u32 %s372, 4
          %s377 = int_to_ptr.hbm [resolvable:$true] %s376
          %379 = dma.vmem_to_hbm [thread:$0]  %s375, 16, %s377, %s362
        $region76: #{tpu_custom_call.1} parent=27 // pred_fallthru
          _
      $region28: #{tpu_custom_call.1} parent=5 // pred_fallthru
        _
      %p380 = scmp.le.s32.totalorder 2, %s27
      // Predicated region
      $region77: #{tpu_custom_call.1} parent=5 // pred_check
        %p381 = pneg %p380
      $region78: #{tpu_custom_call.1} parent=5 // pred_check_branch
        %383 = sbr.rel (%p381) target = $region80
      $region79: #{tpu_custom_call.1} parent=5 // pred_region
        %s384 = ssub.s32 %s27, 2
        // Predicated region
        $region81: #{tpu_custom_call.1} parent=79 // pred_check
          %p385 = pneg %p126
        $region82: #{tpu_custom_call.1} parent=79 // pred_check_branch
          %387 = sbr.rel (%p385) target = $region84
        $region83: #{tpu_custom_call.1} parent=79 // pred_region
          %s388 = sand.u32 %s111, 1
          %s389 = scalar_lea.sflag [#allocation8], %s388
          %s390 = sand.u32 %s111, 1
          %s391 = scalar_lea.vmem [#allocation7], %s390
          %393 = dma.done %s389, 16
        $region84: #{tpu_custom_call.1} parent=79 // pred_fallthru
          _
      $region80: #{tpu_custom_call.1} parent=5 // pred_fallthru
        _
    $region6: #{tpu_custom_call.1} parent=1 // loop_footer
      %s31 = sadd.s32 1, %s27
    $region7: #{tpu_custom_call.1} parent=1 // loop_footer_branch
      %26 = sbr.rel target = $region3
    $region8: #{tpu_custom_call.1} parent=1 // loop_exit
      _
    %394 = vsyncpa [#allocation8], 1
    %s395 = scalar_lea.sflag [#allocation8], 1
    %396 = vsyncpa %s395, 1
  %397 = vsyncmov [#allocation3]
  %s398 = vpop.sfrf %397
  %p399 = scmp.eq.s32.totalorder %s398, 0
  %p400 = pneg %p399
  %402 = shalt.err (%p400)

</llo_original>
